<compile_context>
chip_gen: v7x
topology: tpu7x:2x2x1
jax: 0.10.0
libtpu: 0.0.40
codegen_flags: <defaults>
</compile_context>

<pallas_src>
import jax
import jax.numpy as jnp
from jax.experimental import pallas as pl
from jax.experimental.pallas import tpu as pltpu

HIDDEN = 100
HIDDEN_PAD = 128        # lane/sublane-aligned hidden width
TILE_B_CAP = 4096       # rows per grid step (safe on v5e/v6e/v7x scoped VMEM)


def _round_up(n: int, m: int) -> int:
    return ((n + m - 1) // m) * m


def mlp_kernel(x_ref, w1_ref, b1_ref, w2_ref, b2_ref, w3_ref, b3_ref, o_ref):
    """Fused 3-layer MLP on one TILE_B-column batch slab; batch on lanes."""
    x = x_ref[...]                                   # (2, TILE_B)   f32
    w1 = w1_ref[...]                                 # (128, 2)      f32

    # Layer 1: Linear(2,128).  K=2 -> two VPU outer-product mul-adds (the MXU
    # would waste a full pass on a 2-deep contraction).
    z1 = (w1[:, 0:1] * x[0:1, :]
          + w1[:, 1:2] * x[1:2, :]
          + b1_ref[...])                             # (128, TILE_B)
    t1 = jnp.tanh(z1)                                # sigmoid folded offline
    # (On v6e/v7x the two tanh's could run in bf16 for ~2x EUP throughput;
    #  kept in f32 so the same kernel is also correct/fast on v5e.)

    # Layer 2: Linear(128,128) on the MXU; bf16 operands, f32 accumulation.
    z2 = jnp.dot(w2_ref[...], t1.astype(jnp.bfloat16),
                 preferred_element_type=jnp.float32) + b2_ref[...]
    t2 = jnp.tanh(z2)                                # (128, TILE_B)

    # Layer 3: Linear(128,1).  N=1 -> weighted sublane reduction (mostly VPU
    # adds + one tiny in-vreg reduce); the result is already lane-dense.
    y = jnp.sum(t2 * w3_ref[...], axis=0, keepdims=True) + b3_ref[0]
    o_ref[...] = y.astype(o_ref.dtype)               # (1, TILE_B), unmasked vst


def prepare_params(params):
    """One-time param prep (call OUTSIDE the per-forward jit): fold the
    sigmoid affine constants into the weights, pad hidden 100->128, transpose
    to the batch-on-lanes layout, cast the big matmul weight to bf16."""
    w1, b1, w2, b2, w3, b3 = params

    # sigmoid(z) = 0.5*tanh(z/2) + 0.5, folded so the kernel computes bare tanh.
    w1f, b1f = 0.5 * w1, 0.5 * b1
    w2f = 0.25 * w2
    b2f = 0.5 * b2 + 0.25 * jnp.sum(w2, axis=0, keepdims=True)
    w3f = 0.5 * w3
    b3f = b3 + 0.5 * jnp.sum(w3, axis=0, keepdims=True)

    pad = HIDDEN_PAD - HIDDEN   # padded entries are exactly zero -> tanh(0)=0
    w1t = jnp.pad(w1f, ((0, 0), (0, pad))).T.astype(jnp.float32)        # (128, 2)
    b1c = jnp.pad(b1f, ((0, 0), (0, pad))).reshape(HIDDEN_PAD, 1)       # (128, 1)
    w2t = jnp.pad(w2f, ((0, pad), (0, pad))).T.astype(jnp.bfloat16)     # (128, 128)
    b2c = jnp.pad(b2f, ((0, 0), (0, pad))).reshape(HIDDEN_PAD, 1)       # (128, 1)
    w3c = jnp.pad(w3f, ((0, pad), (0, 0))).astype(jnp.float32)          # (128, 1)
    b3s = b3f.reshape(1).astype(jnp.float32)                            # (1,) SMEM
    return w1t, b1c, w2t, b2c, w3c, b3s


def _choose_tiling(batch: int):
    b128 = _round_up(max(batch, 1), 128)
    if b128 <= 256:
        tile_b = b128                      # tiny batch: single small tile
    else:
        # >= 2 tiles so both TensorCores (v7x megacore) get work; cap the
        # tile so per-step live VMEM stays well under every generation's
        # default scoped-VMEM limit (~8 MiB worst case at 4096 rows).
        tile_b = min(TILE_B_CAP, _round_up((b128 + 1) // 2, 128))
    b_pad = _round_up(max(batch, 1), tile_b)
    return tile_b, b_pad


@jax.jit
def neural_net_forward(x, prepared):
    """x: (B, 2) float32; prepared: output of prepare_params.  Returns (B, 1)."""
    w1t, b1c, w2t, b2c, w3c, b3s = prepared
    B = x.shape[0]
    tile_b, b_pad = _choose_tiling(B)
    num_tiles = b_pad // tile_b

    # Layout plumbing in the wrapper: put batch on the lane axis, pad it out.
    x_t = jnp.pad(x.astype(jnp.float32).T, ((0, 0), (0, b_pad - B)))  # (2, b_pad)

    out = pl.pallas_call(
        mlp_kernel,
        out_shape=jax.ShapeDtypeStruct((1, b_pad), jnp.float32),
        grid=(num_tiles,),
        in_specs=[
            pl.BlockSpec((2, tile_b), lambda i: (0, i)),               # x (streams)
            pl.BlockSpec((HIDDEN_PAD, 2), lambda i: (0, 0)),           # w1^T (resident)
            pl.BlockSpec((HIDDEN_PAD, 1), lambda i: (0, 0)),           # b1 column
            pl.BlockSpec((HIDDEN_PAD, HIDDEN_PAD), lambda i: (0, 0)),  # w2^T (bf16)
            pl.BlockSpec((HIDDEN_PAD, 1), lambda i: (0, 0)),           # b2 column
            pl.BlockSpec((HIDDEN_PAD, 1), lambda i: (0, 0)),           # w3 column
            pl.BlockSpec(memory_space=pltpu.MemorySpace.SMEM),         # b3 scalar
        ],
        out_specs=pl.BlockSpec((1, tile_b), lambda i: (0, i)),
        compiler_params=pltpu.CompilerParams(
            dimension_semantics=("parallel",),
        ),
        cost_estimate=pl.CostEstimate(
            flops=2 * b_pad * HIDDEN_PAD * (HIDDEN_PAD + 3),
            transcendentals=2 * b_pad * HIDDEN_PAD,
            bytes_accessed=(3 * b_pad * 4
                            + HIDDEN_PAD * HIDDEN_PAD * 2
                            + 5 * HIDDEN_PAD * 4 + 4),
        ),
    )(x_t, w1t, b1c, w2t, b2c, w3c, b3s)

    return out[0, :B].reshape(B, 1)


def init_params(key):
    # Deterministic init mimicking nn.Linear's U(-1/sqrt(fan_in), 1/sqrt(fan_in)).
    def linear(key, fan_in, fan_out):
        kw, kb = jax.random.split(key)
        bound = 1.0 / jnp.sqrt(float(fan_in))
        w = jax.random.uniform(kw, (fan_in, fan_out), jnp.float32, -bound, bound)
        b = jax.random.uniform(kb, (1, fan_out), jnp.float32, -bound, bound)
        return w, b

    k1, k2, k3 = jax.random.split(key, 3)
    w1, b1 = linear(k1, 2, 100)
    w2, b2 = linear(k2, 100, 100)
    w3, b3 = linear(k3, 100, 1)
    return (w1, b1, w2, b2, w3, b3)


def reference_forward(x, params):
    # Pure-f32 reference matching the PyTorch module's semantics.
    w1, b1, w2, b2, w3, b3 = params
    h1 = jax.nn.sigmoid(x @ w1 + b1)
    h2 = jax.nn.sigmoid(h1 @ w2 + b2)
    return h2 @ w3 + b3


if __name__ == "__main__":
    key = jax.random.PRNGKey(0)
    kp, kx = jax.random.split(key)

    params = init_params(kp)
    prepared = prepare_params(params)            # hoisted: done once, reused

    x = jax.random.normal(kx, (8, 2), jnp.float32)   # batch=8, in_features=2

    out = jax.block_until_ready(neural_net_forward(x, prepared))
    ref = reference_forward(x, params)

    assert out.shape == (8, 1)
    # Layer-2 MXU operands are bf16 (f32 accumulation); compare against the
    # pure-f32 reference with a tolerance covering bf16 rounding.
    assert jnp.allclose(out, ref, atol=2e-2, rtol=2e-2), (
        f"max abs err {float(jnp.max(jnp.abs(out - ref)))}")

    print("KERNEL_OK")
</pallas_src>

<mosaic_0001>
module attributes {stable_mosaic.version = 11 : i64} {
  func.func @mlp_kernel(%arg0: i32, %arg1: memref<2x128xf32, #tpu.memory_space<vmem>>, %arg2: memref<128x2xf32, #tpu.memory_space<vmem>>, %arg3: memref<128x1xf32, #tpu.memory_space<vmem>>, %arg4: memref<128x128xbf16, #tpu.memory_space<vmem>>, %arg5: memref<128x1xf32, #tpu.memory_space<vmem>>, %arg6: memref<128x1xf32, #tpu.memory_space<vmem>>, %arg7: memref<1xf32, #tpu.memory_space<smem>>, %arg8: memref<1x128xf32, #tpu.memory_space<vmem>>) attributes {dimension_semantics = [#tpu.dimension_semantics<parallel>], iteration_bounds = array<i64: 1>, scalar_prefetch = 0 : i64, scratch_operands = 0 : i64, tpu.core_type = #tpu.core_type<tc>, window_params = [{transform_indices = @transform_0, window_bounds = array<i64: 2, 128>}, {pipeline_mode = #tpu.pipeline_mode<synchronous>, transform_indices = @transform_1, window_bounds = array<i64: 128, 2>}, {pipeline_mode = #tpu.pipeline_mode<synchronous>, transform_indices = @transform_2, window_bounds = array<i64: 128, 1>}, {pipeline_mode = #tpu.pipeline_mode<synchronous>, transform_indices = @transform_3, window_bounds = array<i64: 128, 128>}, {pipeline_mode = #tpu.pipeline_mode<synchronous>, transform_indices = @transform_4, window_bounds = array<i64: 128, 1>}, {pipeline_mode = #tpu.pipeline_mode<synchronous>, transform_indices = @transform_5, window_bounds = array<i64: 128, 1>}, {transform_indices = @transform_6, window_bounds = array<i64: 1>}, {transform_indices = @transform_7, window_bounds = array<i64: 1, 128>}]} {
    %c0 = arith.constant 0 : index
    %c0_0 = arith.constant 0 : index
    %0 = vector.load %arg1[%c0, %c0_0] : memref<2x128xf32, #tpu.memory_space<vmem>>, vector<2x128xf32>
    %c0_1 = arith.constant 0 : index
    %c0_2 = arith.constant 0 : index
    %1 = vector.load %arg2[%c0_1, %c0_2] : memref<128x2xf32, #tpu.memory_space<vmem>>, vector<128x2xf32>
    %2 = vector.extract_strided_slice %1 {offsets = [0, 0], sizes = [128, 1], strides = [1, 1]} : vector<128x2xf32> to vector<128x1xf32>
    %3 = vector.extract_strided_slice %0 {offsets = [0, 0], sizes = [1, 128], strides = [1, 1]} : vector<2x128xf32> to vector<1x128xf32>
    %4 = vector.broadcast %2 : vector<128x1xf32> to vector<128x128xf32>
    %5 = vector.broadcast %3 : vector<1x128xf32> to vector<128x128xf32>
    %6 = arith.mulf %4, %5 : vector<128x128xf32>
    %7 = vector.extract_strided_slice %1 {offsets = [0, 1], sizes = [128, 1], strides = [1, 1]} : vector<128x2xf32> to vector<128x1xf32>
    %8 = vector.extract_strided_slice %0 {offsets = [1, 0], sizes = [1, 128], strides = [1, 1]} : vector<2x128xf32> to vector<1x128xf32>
    %9 = vector.broadcast %7 : vector<128x1xf32> to vector<128x128xf32>
    %10 = vector.broadcast %8 : vector<1x128xf32> to vector<128x128xf32>
    %11 = arith.mulf %9, %10 : vector<128x128xf32>
    %12 = arith.addf %6, %11 : vector<128x128xf32>
    %c0_3 = arith.constant 0 : index
    %c0_4 = arith.constant 0 : index
    %13 = vector.load %arg3[%c0_3, %c0_4] : memref<128x1xf32, #tpu.memory_space<vmem>>, vector<128x1xf32>
    %14 = vector.broadcast %13 : vector<128x1xf32> to vector<128x128xf32>
    %15 = arith.addf %12, %14 : vector<128x128xf32>
    %16 = math.tanh %15 : vector<128x128xf32>
    %c0_5 = arith.constant 0 : index
    %c0_6 = arith.constant 0 : index
    %17 = vector.load %arg4[%c0_5, %c0_6] : memref<128x128xbf16, #tpu.memory_space<vmem>>, vector<128x128xbf16>
    %18 = arith.truncf %16 : vector<128x128xf32> to vector<128x128xbf16>
    %cst = arith.constant dense<0.000000e+00> : vector<128x128xf32>
    %19 = tpu.matmul %17, %18, %cst {dimension_numbers = #tpu.dot_dimension_numbers<[1], [0], [0], [1], [0, 0, 1, 1], [], []>} : vector<128x128xbf16>, vector<128x128xbf16>, vector<128x128xf32> -> vector<128x128xf32>
    %c0_7 = arith.constant 0 : index
    %c0_8 = arith.constant 0 : index
    %20 = vector.load %arg5[%c0_7, %c0_8] : memref<128x1xf32, #tpu.memory_space<vmem>>, vector<128x1xf32>
    %21 = vector.broadcast %20 : vector<128x1xf32> to vector<128x128xf32>
    %22 = arith.addf %19, %21 : vector<128x128xf32>
    %23 = math.tanh %22 : vector<128x128xf32>
    %c0_9 = arith.constant 0 : index
    %c0_10 = arith.constant 0 : index
    %24 = vector.load %arg6[%c0_9, %c0_10] : memref<128x1xf32, #tpu.memory_space<vmem>>, vector<128x1xf32>
    %25 = vector.broadcast %24 : vector<128x1xf32> to vector<128x128xf32>
    %26 = arith.mulf %23, %25 : vector<128x128xf32>
    %cst_11 = arith.constant dense<0.000000e+00> : vector<128xf32>
    %27 = vector.multi_reduction <add>, %26, %cst_11 [0] : vector<128x128xf32> to vector<128xf32>
    %28 = vector.shape_cast %27 : vector<128xf32> to vector<1x128xf32>
    %c0_12 = arith.constant 0 : index
    %29 = memref.load %arg7[%c0_12] : memref<1xf32, #tpu.memory_space<smem>>
    %30 = vector.broadcast %29 : f32 to vector<1x128xf32>
    %31 = arith.addf %28, %30 : vector<1x128xf32>
    %c0_13 = arith.constant 0 : index
    %c0_14 = arith.constant 0 : index
    %32 = vector.load %arg8[%c0_13, %c0_14] : memref<1x128xf32, #tpu.memory_space<vmem>>, vector<1x128xf32>
    tpu.vector_store %arg8[%c0_13, %c0_14], %31 {strides = array<i32>} : memref<1x128xf32, #tpu.memory_space<vmem>>, vector<1x128xf32>,
    return
  }
  func.func @transform_0(%arg0: i32) -> (i32, i32) {
    %c0_i32 = arith.constant 0 : i32
    %c0_i32_0 = arith.constant 0 : i32
    return %c0_i32, %arg0 : i32, i32
  }
  func.func @transform_1(%arg0: i32) -> (i32, i32) {
    %c0_i32 = arith.constant 0 : i32
    %c0_i32_0 = arith.constant 0 : i32
    %c0_i32_1 = arith.constant 0 : i32
    return %c0_i32, %c0_i32_0 : i32, i32
  }
  func.func @transform_2(%arg0: i32) -> (i32, i32) {
    %c0_i32 = arith.constant 0 : i32
    %c0_i32_0 = arith.constant 0 : i32
    %c0_i32_1 = arith.constant 0 : i32
    return %c0_i32, %c0_i32_0 : i32, i32
  }
  func.func @transform_3(%arg0: i32) -> (i32, i32) {
    %c0_i32 = arith.constant 0 : i32
    %c0_i32_0 = arith.constant 0 : i32
    %c0_i32_1 = arith.constant 0 : i32
    return %c0_i32, %c0_i32_0 : i32, i32
  }
  func.func @transform_4(%arg0: i32) -> (i32, i32) {
    %c0_i32 = arith.constant 0 : i32
    %c0_i32_0 = arith.constant 0 : i32
    %c0_i32_1 = arith.constant 0 : i32
    return %c0_i32, %c0_i32_0 : i32, i32
  }
  func.func @transform_5(%arg0: i32) -> (i32, i32) {
    %c0_i32 = arith.constant 0 : i32
    %c0_i32_0 = arith.constant 0 : i32
    %c0_i32_1 = arith.constant 0 : i32
    return %c0_i32, %c0_i32_0 : i32, i32
  }
  func.func @transform_6(%arg0: i32) -> i32 {
    %c0_i32 = arith.constant 0 : i32
    %c0_i32_0 = arith.constant 0 : i32
    return %c0_i32 : i32
  }
  func.func @transform_7(%arg0: i32) -> (i32, i32) {
    %c0_i32 = arith.constant 0 : i32
    %c0_i32_0 = arith.constant 0 : i32
    return %c0_i32, %arg0 : i32, i32
  }
}

</mosaic_0001>

<llo_original>
// kernel: neural_net_forward.1
$region0: #{neural_net_forward.1}
  #allocation0 [shape = 'u32[]', space=smem, size = 0x4, offset = 0x4, fixed_abs, tag = 'smem constant byte address 0x4 - core index']
  #allocation1 [shape = 'u32[144,128]{1,0:T(1,128)}', space=vmem, size = 0x12000, scoped, tag = 'internal scratch']
  #allocation2 [shape = 'f32[1]{0:T(128)S(6)}', space=smem, size = 0x200, scoped, tag = 'scoped memory for neural_net_forward.1']
  %s0 = inlined_call_operand.vmem [shape: f32[2,128], index: 0, kind: input, shape index: {}]
  %s1 = inlined_call_operand.vmem [shape: f32[128,2], index: 1, kind: input, shape index: {}]
  %s2 = inlined_call_operand.vmem [shape: f32[128,1], index: 2, kind: input, shape index: {}]
  %s3 = inlined_call_operand.vmem [shape: bf16[128,128], index: 3, kind: input, shape index: {}]
  %s4 = inlined_call_operand.vmem [shape: f32[128,1], index: 4, kind: input, shape index: {}]
  %s5 = inlined_call_operand.vmem [shape: f32[128,1], index: 5, kind: input, shape index: {}]
  %s6 = inlined_call_operand.<no memory space> [shape: f32[1], index: 6, kind: input, shape index: {}]
  %s7 = inlined_call_operand.vmem [shape: f32[1,128], index: 7, kind: output, shape index: {}]
  %s8 = sld [smem:[#allocation0]]
  $region38: #{neural_net_forward.1} parent=0
    _
  %s10 = ssub.s32 1, %s8
  %s11 = scalar_select 0, %s10, %s8
  %12 = sst [smem:[#allocation2]] %s6
  // Predicated region
  $region2: #{neural_net_forward.1} parent=0 // pred_check
    _
  $region3: #{neural_net_forward.1} parent=0 // pred_check_branch
    %14 = sbr.rel (0) target = $region5
  $region4: #{neural_net_forward.1} parent=0 // pred_region
    _
  $region5: #{neural_net_forward.1} parent=0 // pred_fallthru
    _
  // Predicated region
  $region6: #{neural_net_forward.1} parent=0 // pred_check
    _
  $region7: #{neural_net_forward.1} parent=0 // pred_check_branch
    %16 = sbr.rel (0) target = $region9
  $region8: #{neural_net_forward.1} parent=0 // pred_region
    _
  $region9: #{neural_net_forward.1} parent=0 // pred_fallthru
    _
  // Predicated region
  $region10: #{neural_net_forward.1} parent=0 // pred_check
    _
  $region11: #{neural_net_forward.1} parent=0 // pred_check_branch
    %18 = sbr.rel (0) target = $region13
  $region12: #{neural_net_forward.1} parent=0 // pred_region
    _
  $region13: #{neural_net_forward.1} parent=0 // pred_fallthru
    _
  // Predicated region
  $region14: #{neural_net_forward.1} parent=0 // pred_check
    _
  $region15: #{neural_net_forward.1} parent=0 // pred_check_branch
    %20 = sbr.rel (0) target = $region17
  $region16: #{neural_net_forward.1} parent=0 // pred_region
    _
  $region17: #{neural_net_forward.1} parent=0 // pred_fallthru
    _
  // Predicated region
  $region18: #{neural_net_forward.1} parent=0 // pred_check
    _
  $region19: #{neural_net_forward.1} parent=0 // pred_check_branch
    %22 = sbr.rel (0) target = $region21
  $region20: #{neural_net_forward.1} parent=0 // pred_region
    _
  $region21: #{neural_net_forward.1} parent=0 // pred_fallthru
    _
  // Predicated region
  $region22: #{neural_net_forward.1} parent=0 // pred_check
    _
  $region23: #{neural_net_forward.1} parent=0 // pred_check_branch
    %24 = sbr.rel (0) target = $region25
  $region24: #{neural_net_forward.1} parent=0 // pred_region
    _
  $region25: #{neural_net_forward.1} parent=0 // pred_fallthru
    _
  // Predicated region
  $region26: #{neural_net_forward.1} parent=0 // pred_check
    _
  $region27: #{neural_net_forward.1} parent=0 // pred_check_branch
    %26 = sbr.rel (0) target = $region29
  $region28: #{neural_net_forward.1} parent=0 // pred_region
    _
  $region29: #{neural_net_forward.1} parent=0 // pred_fallthru
    _
  %v28 = vld [vmem:[%s0] sm:$0x3]
  %v29 = vld [vmem:[%s1] sm:$0xff]
  %v30 = vld [vmem:[%s1 + $0x8] sm:$0xff]
  %v31 = vld [vmem:[%s1 + $0x10] sm:$0xff]
  %v32 = vld [vmem:[%s1 + $0x18] sm:$0xff]
  %v33 = vld [vmem:[%s1 + $0x20] sm:$0xff]
  %v34 = vld [vmem:[%s1 + $0x28] sm:$0xff]
  %v35 = vld [vmem:[%s1 + $0x30] sm:$0xff]
  %v36 = vld [vmem:[%s1 + $0x38] sm:$0xff]
  %v37 = vld [vmem:[%s1 + $0x40] sm:$0xff]
  %v38 = vld [vmem:[%s1 + $0x48] sm:$0xff]
  %v39 = vld [vmem:[%s1 + $0x50] sm:$0xff]
  %v40 = vld [vmem:[%s1 + $0x58] sm:$0xff]
  %v41 = vld [vmem:[%s1 + $0x60] sm:$0xff]
  %v42 = vld [vmem:[%s1 + $0x68] sm:$0xff]
  %v43 = vld [vmem:[%s1 + $0x70] sm:$0xff]
  %v44 = vld [vmem:[%s1 + $0x78] sm:$0xff]
  %46 = vset.pattern.permute.xlu0 0
  %47 = vperm.xlu0 %46, %v29
  %v48 = vpop.permute.xlu0 %47
  %51 = vset.pattern.permute.xlu0 0
  %52 = vperm.xlu0 %51, %v30
  %v53 = vpop.permute.xlu0 %52
  %56 = vset.pattern.permute.xlu0 0
  %57 = vperm.xlu0 %56, %v31
  %v58 = vpop.permute.xlu0 %57
  %61 = vset.pattern.permute.xlu0 0
  %62 = vperm.xlu0 %61, %v32
  %v63 = vpop.permute.xlu0 %62
  %66 = vset.pattern.permute.xlu0 0
  %67 = vperm.xlu0 %66, %v33
  %v68 = vpop.permute.xlu0 %67
  %71 = vset.pattern.permute.xlu0 0
  %72 = vperm.xlu0 %71, %v34
  %v73 = vpop.permute.xlu0 %72
  %76 = vset.pattern.permute.xlu0 0
  %77 = vperm.xlu0 %76, %v35
  %v78 = vpop.permute.xlu0 %77
  %81 = vset.pattern.permute.xlu0 0
  %82 = vperm.xlu0 %81, %v36
  %v83 = vpop.permute.xlu0 %82
  %86 = vset.pattern.permute.xlu0 0
  %87 = vperm.xlu0 %86, %v37
  %v88 = vpop.permute.xlu0 %87
  %91 = vset.pattern.permute.xlu0 0
  %92 = vperm.xlu0 %91, %v38
  %v93 = vpop.permute.xlu0 %92
  %96 = vset.pattern.permute.xlu0 0
  %97 = vperm.xlu0 %96, %v39
  %v98 = vpop.permute.xlu0 %97
  %101 = vset.pattern.permute.xlu0 0
  %102 = vperm.xlu0 %101, %v40
  %v103 = vpop.permute.xlu0 %102
  %106 = vset.pattern.permute.xlu0 0
  %107 = vperm.xlu0 %106, %v41
  %v108 = vpop.permute.xlu0 %107
  %111 = vset.pattern.permute.xlu0 0
  %112 = vperm.xlu0 %111, %v42
  %v113 = vpop.permute.xlu0 %112
  %116 = vset.pattern.permute.xlu0 0
  %117 = vperm.xlu0 %116, %v43
  %v118 = vpop.permute.xlu0 %117
  %121 = vset.pattern.permute.xlu0 0
  %122 = vperm.xlu0 %121, %v44
  %v123 = vpop.permute.xlu0 %122
  %v125 = vlaneseq
  %v126 = vshrl.u32 %v125, 7
  %v127 = vsub.s32 0, %v126
  %v128 = vrot.slane %v28, %v127
  %v129 = vmul.f32 %v48, %v128
  %v130 = vmul.f32 %v53, %v128
  %v131 = vmul.f32 %v58, %v128
  %v132 = vmul.f32 %v63, %v128
  %v133 = vmul.f32 %v68, %v128
  %v134 = vmul.f32 %v73, %v128
  %v135 = vmul.f32 %v78, %v128
  %v136 = vmul.f32 %v83, %v128
  %v137 = vmul.f32 %v88, %v128
  %v138 = vmul.f32 %v93, %v128
  %v139 = vmul.f32 %v98, %v128
  %v140 = vmul.f32 %v103, %v128
  %v141 = vmul.f32 %v108, %v128
  %v142 = vmul.f32 %v113, %v128
  %v143 = vmul.f32 %v118, %v128
  %v144 = vmul.f32 %v123, %v128
  %145 = vset.pattern.permute.xlu0 1
  %146 = vperm.xlu0 %145, %v29
  %v147 = vpop.permute.xlu0 %146
  %149 = vset.pattern.permute.xlu0 1
  %150 = vperm.xlu0 %149, %v30
  %v151 = vpop.permute.xlu0 %150
  %153 = vset.pattern.permute.xlu0 1
  %154 = vperm.xlu0 %153, %v31
  %v155 = vpop.permute.xlu0 %154
  %157 = vset.pattern.permute.xlu0 1
  %158 = vperm.xlu0 %157, %v32
  %v159 = vpop.permute.xlu0 %158
  %161 = vset.pattern.permute.xlu0 1
  %162 = vperm.xlu0 %161, %v33
  %v163 = vpop.permute.xlu0 %162
  %165 = vset.pattern.permute.xlu0 1
  %166 = vperm.xlu0 %165, %v34
  %v167 = vpop.permute.xlu0 %166
  %169 = vset.pattern.permute.xlu0 1
  %170 = vperm.xlu0 %169, %v35
  %v171 = vpop.permute.xlu0 %170
  %173 = vset.pattern.permute.xlu0 1
  %174 = vperm.xlu0 %173, %v36
  %v175 = vpop.permute.xlu0 %174
  %177 = vset.pattern.permute.xlu0 1
  %178 = vperm.xlu0 %177, %v37
  %v179 = vpop.permute.xlu0 %178
  %181 = vset.pattern.permute.xlu0 1
  %182 = vperm.xlu0 %181, %v38
  %v183 = vpop.permute.xlu0 %182
  %185 = vset.pattern.permute.xlu0 1
  %186 = vperm.xlu0 %185, %v39
  %v187 = vpop.permute.xlu0 %186
  %189 = vset.pattern.permute.xlu0 1
  %190 = vperm.xlu0 %189, %v40
  %v191 = vpop.permute.xlu0 %190
  %193 = vset.pattern.permute.xlu0 1
  %194 = vperm.xlu0 %193, %v41
  %v195 = vpop.permute.xlu0 %194
  %197 = vset.pattern.permute.xlu0 1
  %198 = vperm.xlu0 %197, %v42
  %v199 = vpop.permute.xlu0 %198
  %201 = vset.pattern.permute.xlu0 1
  %202 = vperm.xlu0 %201, %v43
  %v203 = vpop.permute.xlu0 %202
  %205 = vset.pattern.permute.xlu0 1
  %206 = vperm.xlu0 %205, %v44
  %v207 = vpop.permute.xlu0 %206
  %v209 = vlaneseq
  %v210 = vshrl.u32 %v209, 7
  %v211 = vsub.s32 1, %v210
  %v212 = vrot.slane %v28, %v211
  %v213 = vmul.f32 %v147, %v212
  %v214 = vmul.f32 %v151, %v212
  %v215 = vmul.f32 %v155, %v212
  %v216 = vmul.f32 %v159, %v212
  %v217 = vmul.f32 %v163, %v212
  %v218 = vmul.f32 %v167, %v212
  %v219 = vmul.f32 %v171, %v212
  %v220 = vmul.f32 %v175, %v212
  %v221 = vmul.f32 %v179, %v212
  %v222 = vmul.f32 %v183, %v212
  %v223 = vmul.f32 %v187, %v212
  %v224 = vmul.f32 %v191, %v212
  %v225 = vmul.f32 %v195, %v212
  %v226 = vmul.f32 %v199, %v212
  %v227 = vmul.f32 %v203, %v212
  %v228 = vmul.f32 %v207, %v212
  %v229 = vadd.f32 %v129, %v213
  %v230 = vadd.f32 %v130, %v214
  %v231 = vadd.f32 %v131, %v215
  %v232 = vadd.f32 %v132, %v216
  %v233 = vadd.f32 %v133, %v217
  %v234 = vadd.f32 %v134, %v218
  %v235 = vadd.f32 %v135, %v219
  %v236 = vadd.f32 %v136, %v220
  %v237 = vadd.f32 %v137, %v221
  %v238 = vadd.f32 %v138, %v222
  %v239 = vadd.f32 %v139, %v223
  %v240 = vadd.f32 %v140, %v224
  %v241 = vadd.f32 %v141, %v225
  %v242 = vadd.f32 %v142, %v226
  %v243 = vadd.f32 %v143, %v227
  %v244 = vadd.f32 %v144, %v228
  %v245 = vld [vmem:[%s2] sm:$0xff]
  %v246 = vld [vmem:[%s2 + $0x8] sm:$0xff]
  %v247 = vld [vmem:[%s2 + $0x10] sm:$0xff]
  %v248 = vld [vmem:[%s2 + $0x18] sm:$0xff]
  %v249 = vld [vmem:[%s2 + $0x20] sm:$0xff]
  %v250 = vld [vmem:[%s2 + $0x28] sm:$0xff]
  %v251 = vld [vmem:[%s2 + $0x30] sm:$0xff]
  %v252 = vld [vmem:[%s2 + $0x38] sm:$0xff]
  %v253 = vld [vmem:[%s2 + $0x40] sm:$0xff]
  %v254 = vld [vmem:[%s2 + $0x48] sm:$0xff]
  %v255 = vld [vmem:[%s2 + $0x50] sm:$0xff]
  %v256 = vld [vmem:[%s2 + $0x58] sm:$0xff]
  %v257 = vld [vmem:[%s2 + $0x60] sm:$0xff]
  %v258 = vld [vmem:[%s2 + $0x68] sm:$0xff]
  %v259 = vld [vmem:[%s2 + $0x70] sm:$0xff]
  %v260 = vld [vmem:[%s2 + $0x78] sm:$0xff]
  %262 = vset.pattern.permute.xlu0 0
  %263 = vperm.xlu0 %262, %v245
  %v264 = vpop.permute.xlu0 %263
  %267 = vset.pattern.permute.xlu0 0
  %268 = vperm.xlu0 %267, %v246
  %v269 = vpop.permute.xlu0 %268
  %272 = vset.pattern.permute.xlu0 0
  %273 = vperm.xlu0 %272, %v247
  %v274 = vpop.permute.xlu0 %273
  %277 = vset.pattern.permute.xlu0 0
  %278 = vperm.xlu0 %277, %v248
  %v279 = vpop.permute.xlu0 %278
  %282 = vset.pattern.permute.xlu0 0
  %283 = vperm.xlu0 %282, %v249
  %v284 = vpop.permute.xlu0 %283
  %287 = vset.pattern.permute.xlu0 0
  %288 = vperm.xlu0 %287, %v250
  %v289 = vpop.permute.xlu0 %288
  %292 = vset.pattern.permute.xlu0 0
  %293 = vperm.xlu0 %292, %v251
  %v294 = vpop.permute.xlu0 %293
  %297 = vset.pattern.permute.xlu0 0
  %298 = vperm.xlu0 %297, %v252
  %v299 = vpop.permute.xlu0 %298
  %302 = vset.pattern.permute.xlu0 0
  %303 = vperm.xlu0 %302, %v253
  %v304 = vpop.permute.xlu0 %303
  %307 = vset.pattern.permute.xlu0 0
  %308 = vperm.xlu0 %307, %v254
  %v309 = vpop.permute.xlu0 %308
  %312 = vset.pattern.permute.xlu0 0
  %313 = vperm.xlu0 %312, %v255
  %v314 = vpop.permute.xlu0 %313
  %317 = vset.pattern.permute.xlu0 0
  %318 = vperm.xlu0 %317, %v256
  %v319 = vpop.permute.xlu0 %318
  %322 = vset.pattern.permute.xlu0 0
  %323 = vperm.xlu0 %322, %v257
  %v324 = vpop.permute.xlu0 %323
  %327 = vset.pattern.permute.xlu0 0
  %328 = vperm.xlu0 %327, %v258
  %v329 = vpop.permute.xlu0 %328
  %332 = vset.pattern.permute.xlu0 0
  %333 = vperm.xlu0 %332, %v259
  %v334 = vpop.permute.xlu0 %333
  %337 = vset.pattern.permute.xlu0 0
  %338 = vperm.xlu0 %337, %v260
  %v339 = vpop.permute.xlu0 %338
  %v341 = vadd.f32 %v229, %v264
  %v342 = vadd.f32 %v230, %v269
  %v343 = vadd.f32 %v231, %v274
  %v344 = vadd.f32 %v232, %v279
  %v345 = vadd.f32 %v233, %v284
  %v346 = vadd.f32 %v234, %v289
  %v347 = vadd.f32 %v235, %v294
  %v348 = vadd.f32 %v236, %v299
  %v349 = vadd.f32 %v237, %v304
  %v350 = vadd.f32 %v238, %v309
  %v351 = vadd.f32 %v239, %v314
  %v352 = vadd.f32 %v240, %v319
  %v353 = vadd.f32 %v241, %v324
  %v354 = vadd.f32 %v242, %v329
  %v355 = vadd.f32 %v243, %v334
  %v356 = vadd.f32 %v244, %v339
  %v357 = vtanh.pop %v341
  %v358 = vtanh.pop %v342
  %v359 = vtanh.pop %v343
  %v360 = vtanh.pop %v344
  %v361 = vtanh.pop %v345
  %v362 = vtanh.pop %v346
  %v363 = vtanh.pop %v347
  %v364 = vtanh.pop %v348
  %v365 = vtanh.pop %v349
  %v366 = vtanh.pop %v350
  %v367 = vtanh.pop %v351
  %v368 = vtanh.pop %v352
  %v369 = vtanh.pop %v353
  %v370 = vtanh.pop %v354
  %v371 = vtanh.pop %v355
  %v372 = vtanh.pop %v356
  %v373 = vld [vmem:[%s3] sm:$0xf]
  %v374 = vld [vmem:[%s3 + $0x4] sm:$0xf]
  %v375 = vld [vmem:[%s3 + $0x8] sm:$0xf]
  %v376 = vld [vmem:[%s3 + $0xc] sm:$0xf]
  %v377 = vld [vmem:[%s3 + $0x10] sm:$0xf]
  %v378 = vld [vmem:[%s3 + $0x14] sm:$0xf]
  %v379 = vld [vmem:[%s3 + $0x18] sm:$0xf]
  %v380 = vld [vmem:[%s3 + $0x1c] sm:$0xf]
  %v381 = vld [vmem:[%s3 + $0x20] sm:$0xf]
  %v382 = vld [vmem:[%s3 + $0x24] sm:$0xf]
  %v383 = vld [vmem:[%s3 + $0x28] sm:$0xf]
  %v384 = vld [vmem:[%s3 + $0x2c] sm:$0xf]
  %v385 = vld [vmem:[%s3 + $0x30] sm:$0xf]
  %v386 = vld [vmem:[%s3 + $0x34] sm:$0xf]
  %v387 = vld [vmem:[%s3 + $0x38] sm:$0xf]
  %v388 = vld [vmem:[%s3 + $0x3c] sm:$0xf]
  %v389 = vpack.c.bf16 %v358, %v357
  %v390 = vpack.c.bf16 %v360, %v359
  %v391 = vpack.c.bf16 %v362, %v361
  %v392 = vpack.c.bf16 %v364, %v363
  %v393 = vpack.c.bf16 %v366, %v365
  %v394 = vpack.c.bf16 %v368, %v367
  %v395 = vpack.c.bf16 %v370, %v369
  %v396 = vpack.c.bf16 %v372, %v371
  %v397 = vld [vmem:[%s4] sm:$0xff]
  %v398 = vld [vmem:[%s4 + $0x8] sm:$0xff]
  %v399 = vld [vmem:[%s4 + $0x10] sm:$0xff]
  %v400 = vld [vmem:[%s4 + $0x18] sm:$0xff]
  %v401 = vld [vmem:[%s4 + $0x20] sm:$0xff]
  %v402 = vld [vmem:[%s4 + $0x28] sm:$0xff]
  %v403 = vld [vmem:[%s4 + $0x30] sm:$0xff]
  %v404 = vld [vmem:[%s4 + $0x38] sm:$0xff]
  %v405 = vld [vmem:[%s4 + $0x40] sm:$0xff]
  %v406 = vld [vmem:[%s4 + $0x48] sm:$0xff]
  %v407 = vld [vmem:[%s4 + $0x50] sm:$0xff]
  %v408 = vld [vmem:[%s4 + $0x58] sm:$0xff]
  %v409 = vld [vmem:[%s4 + $0x60] sm:$0xff]
  %v410 = vld [vmem:[%s4 + $0x68] sm:$0xff]
  %v411 = vld [vmem:[%s4 + $0x70] sm:$0xff]
  %v412 = vld [vmem:[%s4 + $0x78] sm:$0xff]
  %414 = vset.pattern.permute.xlu0 0
  %415 = vperm.xlu0 %414, %v397
  %v416 = vpop.permute.xlu0 %415
  %419 = vset.pattern.permute.xlu0 0
  %420 = vperm.xlu0 %419, %v398
  %v421 = vpop.permute.xlu0 %420
  %424 = vset.pattern.permute.xlu0 0
  %425 = vperm.xlu0 %424, %v399
  %v426 = vpop.permute.xlu0 %425
  %429 = vset.pattern.permute.xlu0 0
  %430 = vperm.xlu0 %429, %v400
  %v431 = vpop.permute.xlu0 %430
  %434 = vset.pattern.permute.xlu0 0
  %435 = vperm.xlu0 %434, %v401
  %v436 = vpop.permute.xlu0 %435
  %439 = vset.pattern.permute.xlu0 0
  %440 = vperm.xlu0 %439, %v402
  %v441 = vpop.permute.xlu0 %440
  %444 = vset.pattern.permute.xlu0 0
  %445 = vperm.xlu0 %444, %v403
  %v446 = vpop.permute.xlu0 %445
  %449 = vset.pattern.permute.xlu0 0
  %450 = vperm.xlu0 %449, %v404
  %v451 = vpop.permute.xlu0 %450
  %454 = vset.pattern.permute.xlu0 0
  %455 = vperm.xlu0 %454, %v405
  %v456 = vpop.permute.xlu0 %455
  %459 = vset.pattern.permute.xlu0 0
  %460 = vperm.xlu0 %459, %v406
  %v461 = vpop.permute.xlu0 %460
  %464 = vset.pattern.permute.xlu0 0
  %465 = vperm.xlu0 %464, %v407
  %v466 = vpop.permute.xlu0 %465
  %469 = vset.pattern.permute.xlu0 0
  %470 = vperm.xlu0 %469, %v408
  %v471 = vpop.permute.xlu0 %470
  %474 = vset.pattern.permute.xlu0 0
  %475 = vperm.xlu0 %474, %v409
  %v476 = vpop.permute.xlu0 %475
  %479 = vset.pattern.permute.xlu0 0
  %480 = vperm.xlu0 %479, %v410
  %v481 = vpop.permute.xlu0 %480
  %484 = vset.pattern.permute.xlu0 0
  %485 = vperm.xlu0 %484, %v411
  %v486 = vpop.permute.xlu0 %485
  %489 = vset.pattern.permute.xlu0 0
  %490 = vperm.xlu0 %489, %v412
  %v491 = vpop.permute.xlu0 %490
  %v509 = vunpack.c.l.b16 %v373
  %v510 = vunpack.c.l.b16 %v374
  %v511 = vunpack.c.l.b16 %v375
  %v512 = vunpack.c.l.b16 %v376
  %v513 = vunpack.c.l.b16 %v377
  %v514 = vunpack.c.l.b16 %v378
  %v515 = vunpack.c.l.b16 %v379
  %v516 = vunpack.c.l.b16 %v380
  %v517 = vunpack.c.l.b16 %v381
  %v518 = vunpack.c.l.b16 %v382
  %v519 = vunpack.c.l.b16 %v383
  %v520 = vunpack.c.l.b16 %v384
  %v521 = vunpack.c.l.b16 %v385
  %v522 = vunpack.c.l.b16 %v386
  %v523 = vunpack.c.l.b16 %v387
  %v524 = vunpack.c.l.b16 %v388
  %v525 = vpack.c.b16 %v510, %v509
  %v526 = vpack.c.b16 %v512, %v511
  %v527 = vpack.c.b16 %v514, %v513
  %v528 = vpack.c.b16 %v516, %v515
  %v529 = vpack.c.b16 %v518, %v517
  %v530 = vpack.c.b16 %v520, %v519
  %v531 = vpack.c.b16 %v522, %v521
  %v532 = vpack.c.b16 %v524, %v523
  %541 = vmatprep.subr.bf16.mxu0 0
  %542 = vmatpush1.bf16.msra.mxu0 %v389
  %543 = vmatprep.subr.bf16.mxu0 0
  %544 = vmatpush1.bf16.msra.mxu0 %v390
  %545 = vmatprep.subr.bf16.mxu0 0
  %546 = vmatpush1.bf16.msra.mxu0 %v391
  %547 = vmatprep.subr.bf16.mxu0 0
  %548 = vmatpush1.bf16.msra.mxu0 %v392
  %549 = vmatprep.subr.bf16.mxu0 0
  %550 = vmatpush1.bf16.msra.mxu0 %v393
  %551 = vmatprep.subr.bf16.mxu0 0
  %552 = vmatpush1.bf16.msra.mxu0 %v394
  %553 = vmatprep.subr.bf16.mxu0 0
  %554 = vmatpush1.bf16.msra.mxu0 %v395
  %555 = vmatprep.subr.bf16.mxu0 0
  %556 = vmatpush1.bf16.msra.mxu0 %v396
  %557 = vmatprep.subr.bf16.mxu0 0
  %558 = vmatpush1.bf16.msra.mxu0 0
  %559 = vmatprep.subr.bf16.mxu0 0
  %560 = vmatpush1.bf16.msra.mxu0 0
  %561 = vmatprep.subr.bf16.mxu0 0
  %562 = vmatpush1.bf16.msra.mxu0 0
  %563 = vmatprep.subr.bf16.mxu0 0
  %564 = vmatpush1.bf16.msra.mxu0 0
  %565 = vmatprep.subr.bf16.mxu0 0
  %566 = vmatpush1.bf16.msra.mxu0 0
  %567 = vmatprep.subr.bf16.mxu0 0
  %568 = vmatpush1.bf16.msra.mxu0 0
  %569 = vmatprep.subr.bf16.mxu0 0
  %570 = vmatpush1.bf16.msra.mxu0 0
  %571 = vmatprep.subr.bf16.mxu0 0
  %572 = vmatpush1.bf16.msra.mxu0 0
  %573 = vmatprep.mubr.bf16.mxu0 0
  %574 = vmatmul.mubr.bf16.gmra.mrb[0].mxu0 %v525
  %v575 = vpop.f32.mrb[0].mxu0
  %v576 = vadd.f32 %v416, %v575
  %v577 = vpop.f32.mrb[0].mxu0
  %v578 = vpop.f32.mrb[0].mxu0
  %v579 = vadd.f32 %v421, %v578
  %v580 = vpop.f32.mrb[0].mxu0
  %581 = vmatprep.mubr.bf16.mxu0 0
  %582 = vmatmul.mubr.bf16.gmra.mrb[0].mxu0 %v526
  %v583 = vpop.f32.mrb[0].mxu0
  %v584 = vadd.f32 %v426, %v583
  %v585 = vpop.f32.mrb[0].mxu0
  %v586 = vpop.f32.mrb[0].mxu0
  %v587 = vadd.f32 %v431, %v586
  %v588 = vpop.f32.mrb[0].mxu0
  %589 = vmatprep.mubr.bf16.mxu0 0
  %590 = vmatmul.mubr.bf16.gmra.mrb[0].mxu0 %v527
  %v591 = vpop.f32.mrb[0].mxu0
  %v592 = vadd.f32 %v436, %v591
  %v593 = vpop.f32.mrb[0].mxu0
  %v594 = vpop.f32.mrb[0].mxu0
  %v595 = vadd.f32 %v441, %v594
  %v596 = vpop.f32.mrb[0].mxu0
  %597 = vmatprep.mubr.bf16.mxu0 0
  %598 = vmatmul.mubr.bf16.gmra.mrb[0].mxu0 %v528
  %v599 = vpop.f32.mrb[0].mxu0
  %v600 = vadd.f32 %v446, %v599
  %v601 = vpop.f32.mrb[0].mxu0
  %v602 = vpop.f32.mrb[0].mxu0
  %v603 = vadd.f32 %v451, %v602
  %v604 = vpop.f32.mrb[0].mxu0
  %605 = vmatprep.mubr.bf16.mxu0 0
  %606 = vmatmul.mubr.bf16.gmra.mrb[0].mxu0 %v529
  %v607 = vpop.f32.mrb[0].mxu0
  %v608 = vadd.f32 %v456, %v607
  %v609 = vpop.f32.mrb[0].mxu0
  %v610 = vpop.f32.mrb[0].mxu0
  %v611 = vadd.f32 %v461, %v610
  %v612 = vpop.f32.mrb[0].mxu0
  %613 = vmatprep.mubr.bf16.mxu0 0
  %614 = vmatmul.mubr.bf16.gmra.mrb[0].mxu0 %v530
  %v615 = vpop.f32.mrb[0].mxu0
  %v616 = vadd.f32 %v466, %v615
  %v617 = vpop.f32.mrb[0].mxu0
  %v618 = vpop.f32.mrb[0].mxu0
  %v619 = vadd.f32 %v471, %v618
  %v620 = vpop.f32.mrb[0].mxu0
  %621 = vmatprep.mubr.bf16.mxu0 0
  %622 = vmatmul.mubr.bf16.gmra.mrb[0].mxu0 %v531
  %v623 = vpop.f32.mrb[0].mxu0
  %v624 = vadd.f32 %v476, %v623
  %v625 = vpop.f32.mrb[0].mxu0
  %v626 = vpop.f32.mrb[0].mxu0
  %v627 = vadd.f32 %v481, %v626
  %v628 = vpop.f32.mrb[0].mxu0
  %629 = vmatprep.mubr.bf16.mxu0 0
  %630 = vmatmul.mubr.bf16.gmra.mrb[0].mxu0 %v532
  %v631 = vpop.f32.mrb[0].mxu0
  %v632 = vadd.f32 %v486, %v631
  %v633 = vpop.f32.mrb[0].mxu0
  %v634 = vpop.f32.mrb[0].mxu0
  %v635 = vadd.f32 %v491, %v634
  %v636 = vpop.f32.mrb[0].mxu0
  %637 = vdwg.mxu0
  %v638 = vtanh.pop %v576
  %v639 = vtanh.pop %v579
  %v640 = vtanh.pop %v584
  %v641 = vtanh.pop %v587
  %v642 = vtanh.pop %v592
  %v643 = vtanh.pop %v595
  %v644 = vtanh.pop %v600
  %v645 = vtanh.pop %v603
  %v646 = vtanh.pop %v608
  %v647 = vtanh.pop %v611
  %v648 = vtanh.pop %v616
  %v649 = vtanh.pop %v619
  %v650 = vtanh.pop %v624
  %v651 = vtanh.pop %v627
  %v652 = vtanh.pop %v632
  %v653 = vtanh.pop %v635
  %v654 = vld [vmem:[%s5] sm:$0xff]
  %v655 = vld [vmem:[%s5 + $0x8] sm:$0xff]
  %v656 = vld [vmem:[%s5 + $0x10] sm:$0xff]
  %v657 = vld [vmem:[%s5 + $0x18] sm:$0xff]
  %v658 = vld [vmem:[%s5 + $0x20] sm:$0xff]
  %v659 = vld [vmem:[%s5 + $0x28] sm:$0xff]
  %v660 = vld [vmem:[%s5 + $0x30] sm:$0xff]
  %v661 = vld [vmem:[%s5 + $0x38] sm:$0xff]
  %v662 = vld [vmem:[%s5 + $0x40] sm:$0xff]
  %v663 = vld [vmem:[%s5 + $0x48] sm:$0xff]
  %v664 = vld [vmem:[%s5 + $0x50] sm:$0xff]
  %v665 = vld [vmem:[%s5 + $0x58] sm:$0xff]
  %v666 = vld [vmem:[%s5 + $0x60] sm:$0xff]
  %v667 = vld [vmem:[%s5 + $0x68] sm:$0xff]
  %v668 = vld [vmem:[%s5 + $0x70] sm:$0xff]
  %v669 = vld [vmem:[%s5 + $0x78] sm:$0xff]
  %671 = vset.pattern.permute.xlu0 0
  %672 = vperm.xlu0 %671, %v654
  %v673 = vpop.permute.xlu0 %672
  %676 = vset.pattern.permute.xlu0 0
  %677 = vperm.xlu0 %676, %v655
  %v678 = vpop.permute.xlu0 %677
  %681 = vset.pattern.permute.xlu0 0
  %682 = vperm.xlu0 %681, %v656
  %v683 = vpop.permute.xlu0 %682
  %686 = vset.pattern.permute.xlu0 0
  %687 = vperm.xlu0 %686, %v657
  %v688 = vpop.permute.xlu0 %687
  %691 = vset.pattern.permute.xlu0 0
  %692 = vperm.xlu0 %691, %v658
  %v693 = vpop.permute.xlu0 %692
  %696 = vset.pattern.permute.xlu0 0
  %697 = vperm.xlu0 %696, %v659
  %v698 = vpop.permute.xlu0 %697
  %701 = vset.pattern.permute.xlu0 0
  %702 = vperm.xlu0 %701, %v660
  %v703 = vpop.permute.xlu0 %702
  %706 = vset.pattern.permute.xlu0 0
  %707 = vperm.xlu0 %706, %v661
  %v708 = vpop.permute.xlu0 %707
  %711 = vset.pattern.permute.xlu0 0
  %712 = vperm.xlu0 %711, %v662
  %v713 = vpop.permute.xlu0 %712
  %716 = vset.pattern.permute.xlu0 0
  %717 = vperm.xlu0 %716, %v663
  %v718 = vpop.permute.xlu0 %717
  %721 = vset.pattern.permute.xlu0 0
  %722 = vperm.xlu0 %721, %v664
  %v723 = vpop.permute.xlu0 %722
  %726 = vset.pattern.permute.xlu0 0
  %727 = vperm.xlu0 %726, %v665
  %v728 = vpop.permute.xlu0 %727
  %731 = vset.pattern.permute.xlu0 0
  %732 = vperm.xlu0 %731, %v666
  %v733 = vpop.permute.xlu0 %732
  %736 = vset.pattern.permute.xlu0 0
  %737 = vperm.xlu0 %736, %v667
  %v738 = vpop.permute.xlu0 %737
  %741 = vset.pattern.permute.xlu0 0
  %742 = vperm.xlu0 %741, %v668
  %v743 = vpop.permute.xlu0 %742
  %746 = vset.pattern.permute.xlu0 0
  %747 = vperm.xlu0 %746, %v669
  %v748 = vpop.permute.xlu0 %747
  %v750 = vmul.f32 %v638, %v673
  %v751 = vmul.f32 %v639, %v678
  %v752 = vmul.f32 %v640, %v683
  %v753 = vmul.f32 %v641, %v688
  %v754 = vmul.f32 %v642, %v693
  %v755 = vmul.f32 %v643, %v698
  %v756 = vmul.f32 %v644, %v703
  %v757 = vmul.f32 %v645, %v708
  %v758 = vmul.f32 %v646, %v713
  %v759 = vmul.f32 %v647, %v718
  %v760 = vmul.f32 %v648, %v723
  %v761 = vmul.f32 %v649, %v728
  %v762 = vmul.f32 %v650, %v733
  %v763 = vmul.f32 %v651, %v738
  %v764 = vmul.f32 %v652, %v743
  %v765 = vmul.f32 %v653, %v748
  %v766 = vadd.f32 %v750, %v751
  %v767 = vadd.f32 %v766, %v752
  %v768 = vadd.f32 %v767, %v753
  %v769 = vadd.f32 %v768, %v754
  %v770 = vadd.f32 %v769, %v755
  %v771 = vadd.f32 %v770, %v756
  %v772 = vadd.f32 %v771, %v757
  %v773 = vadd.f32 %v772, %v758
  %v774 = vadd.f32 %v773, %v759
  %v775 = vadd.f32 %v774, %v760
  %v776 = vadd.f32 %v775, %v761
  %v777 = vadd.f32 %v776, %v762
  %v778 = vadd.f32 %v777, %v763
  %v779 = vadd.f32 %v778, %v764
  %v780 = vadd.f32 %v779, %v765
  %v781 = vrot.slane %v780, 4
  %v782 = vadd.f32 %v780, %v781
  %v783 = vrot.slane %v782, 2
  %v784 = vadd.f32 %v782, %v783
  %v785 = vrot.slane %v784, 1
  %v786 = vadd.f32 %v784, %v785
  %s787 = sld [smem:[#allocation2]]
  %v788 = vstv %s787
  %v789 = vadd.f32 %v786, %v788
  %790 = vst [vmem:[%s7] sm:$0x1] %v789
  // Predicated region
  $region30: #{neural_net_forward.1} parent=0 // pred_check
    _
  $region31: #{neural_net_forward.1} parent=0 // pred_check_branch
    %792 = sbr.rel (0) target = $region33
  $region32: #{neural_net_forward.1} parent=0 // pred_region
    _
  $region33: #{neural_net_forward.1} parent=0 // pred_fallthru
    _
  // Predicated region
  $region34: #{neural_net_forward.1} parent=0 // pred_check
    _
  $region35: #{neural_net_forward.1} parent=0 // pred_check_branch
    %794 = sbr.rel (0) target = $region37
  $region36: #{neural_net_forward.1} parent=0 // pred_region
    _
  $region37: #{neural_net_forward.1} parent=0 // pred_fallthru
    _

</llo_original>
